<compile_context>
chip_gen: v7x
topology: tpu7x:2x2x1
jax: 0.10.0
libtpu: 0.0.40
codegen_flags: <defaults>
</compile_context>

<pallas_src>
import functools

import jax
import jax.numpy as jnp
from jax.experimental import pallas as pl
from jax.experimental.pallas import tpu as pltpu


def _round_up(v: int, m: int) -> int:
    return ((v + m - 1) // m) * m


def _distance_kernel(x_ref, ct_ref, csq_ref, lab_ref, o_ref, *,
                     batch, num_classes, tile_b, tile_c,
                     batch_padded, classes_padded, cross_in_bf16):
    i = pl.program_id(0)   # batch-tile index
    j = pl.program_id(1)   # class-tile index

    x = x_ref[...]                                       # (TB, D) float32
    x_sq = jnp.sum(x * x, axis=1, keepdims=True)         # (TB, 1)

    # Cross term on the MXU. Centers are already transposed, pre-scaled by -2
    # and (optionally) cast to bf16 once in the wrapper — no per-tile cast of
    # the big (D, TC) slab, only the small x tile is cast here.
    if cross_in_bf16:
        cross = jnp.dot(x.astype(jnp.bfloat16), ct_ref[...],
                        preferred_element_type=jnp.float32)
    else:
        cross = jnp.dot(x, ct_ref[...], preferred_element_type=jnp.float32)

    distmat = x_sq + csq_ref[...] + cross                # (TB, TC) float32

    # Drop mask: true-class column per row; padded class columns / batch rows
    # are only masked when such padding actually exists (static conditionals).
    labels = lab_ref[...]                                # (TB, 1) int32
    class_ids = jax.lax.broadcasted_iota(jnp.int32, (1, tile_c), 1) + j * tile_c
    drop = labels == class_ids                           # (TB, TC) via broadcast
    if classes_padded:
        drop = drop | (class_ids >= num_classes)
    if batch_padded:
        row_ids = jax.lax.broadcasted_iota(jnp.int32, (tile_b, 1), 0) + i * tile_b
        drop = drop | (row_ids >= batch)

    # Clamp to >= 0 before sqrt: FP cancellation can make distmat slightly
    # negative, and sqrt(neg) -> NaN would poison the reduction.
    vals = jnp.clip(jnp.sqrt(jnp.maximum(distmat, 0.0)), 1e-8, 1e8)
    vals = jnp.where(drop, 0.0, vals)

    # Lane-parallel partial sum: reduce only along rows (sublanes). The final
    # cross-lane / cross-tile reduce + divide is done in the wrapper.
    o_ref[...] = jnp.sum(vals, axis=0, keepdims=True).reshape(1, 1, tile_c)


def distance_loss(x, centers, labels, *, tile_b=None, tile_c_max=2048,
                  cross_in_bf16=None):
    """x: (B, D) float, centers: (C, D) float, labels: (B,) int -> scalar f32."""
    x = x.astype(jnp.float32)
    centers = centers.astype(jnp.float32)
    B, D = x.shape
    C, D2 = centers.shape
    assert D == D2, "z_dim mismatch between x and centers"
    if C < 2:
        raise ValueError("num_classes must be >= 2 (mean over C-1 entries).")

    # ---- hardware-derived budgets -----------------------------------------
    try:
        vmem_cap = int(pltpu.get_tpu_info().vmem_capacity_bytes)
    except Exception:
        vmem_cap = 64 * 1024 * 1024            # conservative (v7x per-core)
    vmem_limit = (min(vmem_cap, 128 * 1024 * 1024) * 3) // 4   # keep headroom

    if cross_in_bf16 is None:
        # bf16 MXU path (f32 accumulate) pays off once the kernel is matmul
        # bound; keep f32 for small problems so results match the reference.
        cross_in_bf16 = (D >= 256 and C >= 256)

    # ---- batch tiling -------------------------------------------------------
    if tile_b is None:
        tile_b = 256 if vmem_cap <= 64 * 1024 * 1024 else 512  # smaller on v7x
    TB = min(_round_up(B, 8), _round_up(tile_b, 8))
    B_pad = _round_up(B, TB)
    nb = B_pad // TB

    # ---- class tiling (lane-dense, MXU-width friendly, VMEM-capped) --------
    ct_bytes = 2 if cross_in_bf16 else 4
    # Keep the double-buffered centers^T tile within ~1/4 of the VMEM budget.
    cap = (vmem_limit // 4) // max(1, 2 * D * ct_bytes)
    cap = max(128, (cap // 128) * 128)
    if C <= 128:
        TC = 128
    else:
        TC = min(_round_up(C, 256), int(tile_c_max), cap)   # 256-wide MXU in N
        TC = max(128, (TC // 128) * 128)
    C_pad = _round_up(C, TC)
    nc = C_pad // TC

    # ---- padding ------------------------------------------------------------
    labels_i = labels.astype(jnp.int32).reshape(B, 1)
    if B_pad != B:
        x_p = jnp.concatenate([x, jnp.zeros((B_pad - B, D), jnp.float32)], axis=0)
        labels_p = jnp.concatenate(
            [labels_i, jnp.full((B_pad - B, 1), -1, jnp.int32)], axis=0)
    else:
        x_p, labels_p = x, labels_i

    if C_pad != C:
        c_p = jnp.concatenate(
            [centers, jnp.zeros((C_pad - C, D), jnp.float32)], axis=0)
    else:
        c_p = centers

    # Batch-independent pieces, hoisted once per call:
    c_sq = jnp.sum(c_p * c_p, axis=1)[None, :]       # (1, C_pad) f32
    c_t = (-2.0) * c_p.T                             # (D, C_pad), -2 folded in
    if cross_in_bf16:
        c_t = c_t.astype(jnp.bfloat16)               # cast once, not per tile

    denom = float(B * (C - 1))

    kernel = functools.partial(
        _distance_kernel,
        batch=B, num_classes=C, tile_b=TB, tile_c=TC,
        batch_padded=(B_pad != B), classes_padded=(C_pad != C),
        cross_in_bf16=cross_in_bf16)

    partials = pl.pallas_call(
        kernel,
        out_shape=jax.ShapeDtypeStruct((nb, 1, C_pad), jnp.float32),
        grid_spec=pltpu.PrefetchScalarGridSpec(
            num_scalar_prefetch=0,
            grid=(nb, nc),
            in_specs=[
                pl.BlockSpec((TB, D), lambda i, j: (i, 0)),   # x tile (constant over j)
                pl.BlockSpec((D, TC), lambda i, j: (0, j)),   # -2 * centers^T tile
                pl.BlockSpec((1, TC), lambda i, j: (0, j)),   # ||c||^2 tile
                pl.BlockSpec((TB, 1), lambda i, j: (i, 0)),   # labels tile
            ],
            out_specs=pl.BlockSpec((1, 1, TC), lambda i, j: (i, 0, j)),
        ),
        compiler_params=pltpu.CompilerParams(
            dimension_semantics=("parallel", "parallel"),  # megacore-shardable
            vmem_limit_bytes=int(vmem_limit),
        ),
    )(x_p, c_t, c_sq, labels_p)

    # Tiny final reduction + mean in the wrapper (numerically safer than a
    # serial scalar accumulator across all tiles).
    return jnp.sum(partials) / jnp.float32(denom)


if __name__ == "__main__":
    # Small shapes consistent with the module: args.num_classes, args.z_dim.
    batch_size = 8
    num_classes = 4
    z_dim = 32

    key = jax.random.PRNGKey(0)
    k_x, k_c, k_l = jax.random.split(key, 3)

    x = jax.random.normal(k_x, (batch_size, z_dim), dtype=jnp.float32)
    # Deterministic stand-in for the torch.randn(num_classes, z_dim) parameter.
    centers = jax.random.normal(k_c, (num_classes, z_dim), dtype=jnp.float32)
    labels = jax.random.randint(k_l, (batch_size,), 0, num_classes, dtype=jnp.int32)

    loss = distance_loss(x, centers, labels)
    jax.block_until_ready(loss)

    # Pure-JAX reference (same math as the torch forward).
    distmat = (
        jnp.sum(x ** 2, axis=1, keepdims=True)
        + jnp.sum(centers ** 2, axis=1, keepdims=True).T
        - 2.0 * x @ centers.T
    )
    mask = labels[:, None] == jnp.arange(num_classes)[None, :]
    vals = jnp.clip(jnp.sqrt(jnp.maximum(distmat, 0.0)), 1e-8, 1e8)
    ref = jnp.sum(jnp.where(mask, 0.0, vals)) / (batch_size * (num_classes - 1))

    assert jnp.allclose(loss, ref, rtol=1e-5, atol=1e-5), (loss, ref)
    print("KERNEL_OK")
</pallas_src>

<mosaic_0001>
module attributes {stable_mosaic.version = 11 : i64} {
  func.func @_distance_kernel(%arg0: i32, %arg1: i32, %arg2: memref<8x32xf32, #tpu.memory_space<vmem>>, %arg3: memref<32x128xf32, #tpu.memory_space<vmem>>, %arg4: memref<1x128xf32, #tpu.memory_space<vmem>>, %arg5: memref<8x1xi32, #tpu.memory_space<vmem>>, %arg6: memref<1x1x128xf32, #tpu.memory_space<vmem>>) attributes {dimension_semantics = [#tpu.dimension_semantics<parallel>, #tpu.dimension_semantics<parallel>], iteration_bounds = array<i64: 1, 1>, scalar_prefetch = 0 : i64, scratch_operands = 0 : i64, tpu.core_type = #tpu.core_type<tc>, window_params = [{transform_indices = @transform_0, window_bounds = array<i64: 8, 32>}, {transform_indices = @transform_1, window_bounds = array<i64: 32, 128>}, {transform_indices = @transform_2, window_bounds = array<i64: 1, 128>}, {transform_indices = @transform_3, window_bounds = array<i64: 8, 1>}, {transform_indices = @transform_4, window_bounds = array<i64: 1, 1, 128>}]} {
    %c0 = arith.constant 0 : index
    %c0_0 = arith.constant 0 : index
    %0 = vector.load %arg2[%c0, %c0_0] : memref<8x32xf32, #tpu.memory_space<vmem>>, vector<8x32xf32>
    %1 = arith.mulf %0, %0 : vector<8x32xf32>
    %cst = arith.constant dense<0.000000e+00> : vector<8xf32>
    %2 = vector.multi_reduction <add>, %1, %cst [1] : vector<8x32xf32> to vector<8xf32>
    %3 = vector.shape_cast %2 : vector<8xf32> to vector<8x1xf32>
    %c0_1 = arith.constant 0 : index
    %c0_2 = arith.constant 0 : index
    %4 = vector.load %arg3[%c0_1, %c0_2] : memref<32x128xf32, #tpu.memory_space<vmem>>, vector<32x128xf32>
    %cst_3 = arith.constant dense<0.000000e+00> : vector<8x128xf32>
    %5 = tpu.matmul %0, %4, %cst_3 {dimension_numbers = #tpu.dot_dimension_numbers<[1], [0], [0], [1], [0, 0, 1, 1], [], []>} : vector<8x32xf32>, vector<32x128xf32>, vector<8x128xf32> -> vector<8x128xf32>
    %c0_4 = arith.constant 0 : index
    %c0_5 = arith.constant 0 : index
    %6 = vector.load %arg4[%c0_4, %c0_5] : memref<1x128xf32, #tpu.memory_space<vmem>>, vector<1x128xf32>
    %7 = vector.broadcast %3 : vector<8x1xf32> to vector<8x128xf32>
    %8 = vector.broadcast %6 : vector<1x128xf32> to vector<8x128xf32>
    %9 = arith.addf %7, %8 : vector<8x128xf32>
    %10 = arith.addf %9, %5 : vector<8x128xf32>
    %c0_6 = arith.constant 0 : index
    %c0_7 = arith.constant 0 : index
    %11 = vector.load %arg5[%c0_6, %c0_7] : memref<8x1xi32, #tpu.memory_space<vmem>>, vector<8x1xi32>
    %12 = tpu.iota {dimensions = array<i32: 1>} : vector<1x128xi32>
    %c128_i32 = arith.constant 128 : i32
    %13 = arith.muli %arg1, %c128_i32 : i32
    %14 = vector.broadcast %13 : i32 to vector<1x128xi32>
    %15 = arith.addi %12, %14 : vector<1x128xi32>
    %16 = vector.broadcast %11 : vector<8x1xi32> to vector<8x128xi32>
    %17 = vector.broadcast %15 : vector<1x128xi32> to vector<8x128xi32>
    %18 = arith.cmpi eq, %16, %17 : vector<8x128xi32>
    %c4_i32 = arith.constant 4 : i32
    %19 = vector.broadcast %c4_i32 : i32 to vector<1x128xi32>
    %20 = arith.cmpi sge, %15, %19 : vector<1x128xi32>
    %21 = vector.broadcast %20 : vector<1x128xi1> to vector<8x128xi1>
    %22 = arith.ori %18, %21 : vector<8x128xi1>
    %cst_8 = arith.constant 0.000000e+00 : f32
    %23 = vector.broadcast %cst_8 : f32 to vector<8x128xf32>
    %24 = arith.maximumf %10, %23 : vector<8x128xf32>
    %25 = math.sqrt %24 : vector<8x128xf32>
    %cst_9 = arith.constant 9.99999993E-9 : f32
    %cst_10 = arith.constant 1.000000e+08 : f32
    %26 = vector.broadcast %cst_9 : f32 to vector<8x128xf32>
    %27 = arith.maximumf %26, %25 : vector<8x128xf32>
    %28 = vector.broadcast %cst_10 : f32 to vector<8x128xf32>
    %29 = arith.minimumf %28, %27 : vector<8x128xf32>
    %cst_11 = arith.constant 0.000000e+00 : f32
    %30 = vector.broadcast %cst_11 : f32 to vector<8x128xf32>
    %31 = arith.select %22, %30, %29 : vector<8x128xi1>, vector<8x128xf32>
    %cst_12 = arith.constant dense<0.000000e+00> : vector<128xf32>
    %32 = vector.multi_reduction <add>, %31, %cst_12 [0] : vector<8x128xf32> to vector<128xf32>
    %33 = vector.shape_cast %32 : vector<128xf32> to vector<1x128xf32>
    %34 = vector.shape_cast %33 : vector<1x128xf32> to vector<1x1x128xf32>
    %c0_13 = arith.constant 0 : index
    %c0_14 = arith.constant 0 : index
    %c0_15 = arith.constant 0 : index
    %35 = vector.load %arg6[%c0_13, %c0_14, %c0_15] : memref<1x1x128xf32, #tpu.memory_space<vmem>>, vector<1x1x128xf32>
    tpu.vector_store %arg6[%c0_13, %c0_14, %c0_15], %34 {strides = array<i32>} : memref<1x1x128xf32, #tpu.memory_space<vmem>>, vector<1x1x128xf32>,
    return
  }
  func.func @transform_0(%arg0: i32, %arg1: i32) -> (i32, i32) {
    %c0_i32 = arith.constant 0 : i32
    %c0_i32_0 = arith.constant 0 : i32
    return %arg0, %c0_i32 : i32, i32
  }
  func.func @transform_1(%arg0: i32, %arg1: i32) -> (i32, i32) {
    %c0_i32 = arith.constant 0 : i32
    %c0_i32_0 = arith.constant 0 : i32
    return %c0_i32, %arg1 : i32, i32
  }
  func.func @transform_2(%arg0: i32, %arg1: i32) -> (i32, i32) {
    %c0_i32 = arith.constant 0 : i32
    %c0_i32_0 = arith.constant 0 : i32
    return %c0_i32, %arg1 : i32, i32
  }
  func.func @transform_3(%arg0: i32, %arg1: i32) -> (i32, i32) {
    %c0_i32 = arith.constant 0 : i32
    %c0_i32_0 = arith.constant 0 : i32
    return %arg0, %c0_i32 : i32, i32
  }
  func.func @transform_4(%arg0: i32, %arg1: i32) -> (i32, i32, i32) {
    %c0_i32 = arith.constant 0 : i32
    %c0_i32_0 = arith.constant 0 : i32
    return %arg0, %c0_i32, %arg1 : i32, i32, i32
  }
}

</mosaic_0001>

<llo_original>
// kernel: tpu_custom_call.1
$region0: #{tpu_custom_call.1}
  #allocation0 [shape = 'u32[]', space=smem, size = 0x4, offset = 0x4, fixed_abs, tag = 'smem constant byte address 0x4 - core index']
  #allocation1 [shape = 'u32[144,128]{1,0:T(1,128)}', space=vmem, size = 0x12000, scoped, tag = 'internal scratch']
  %s0 = inlined_call_operand.vmem [shape: f32[8,32], index: 0, kind: input, shape index: {}]
  %s1 = inlined_call_operand.hbm [shape: f32[32,128], index: 1, kind: input, shape index: {}]
  %s2 = inlined_call_operand.vmem [shape: f32[1,128], index: 2, kind: input, shape index: {}]
  %s3 = inlined_call_operand.vmem [shape: s32[8,1], index: 3, kind: input, shape index: {}]
  %s4 = inlined_call_operand.hbm [shape: f32[1,1,128], index: 4, kind: output, shape index: {}]
  %s5 = sld [smem:[#allocation0]]
  $region30: #{tpu_custom_call.1} parent=0
    _
  %s7 = ssub.s32 1, %s5
  %s8 = scalar_select 0, %s7, %s5
  $region1: #{tpu_custom_call.1} parent=0
    #allocation2 [shape = 'u8[16384]{0}', space=vmem, size = 0x4000, scoped, tag = 'input window, operand 1, single buffered']
    #allocation3 [shape = 's32[1]{0}', space=sflag, size = 0x4, scoped, tag = 'scoped memory for tpu_custom_call.1']
    #allocation4 [shape = 's32[1]{0}', space=sflag, size = 0x4, scoped, tag = 'scoped memory for tpu_custom_call.1']
    #allocation5 [shape = 'u8[512]{0}', space=vmem, size = 0x400, scoped, tag = 'output window, operand 0, single buffered']
    %9 = vsyncpa [#allocation3], 0
    %10 = vsyncpa [#allocation4], 0
    // Predicated region
    $region2: #{tpu_custom_call.1} parent=1 // pred_check
      _
    $region3: #{tpu_custom_call.1} parent=1 // pred_check_branch
      %12 = sbr.rel (0) target = $region5
    $region4: #{tpu_custom_call.1} parent=1 // pred_region
      _
    $region5: #{tpu_custom_call.1} parent=1 // pred_fallthru
      _
    // Predicated region
    $region6: #{tpu_custom_call.1} parent=1 // pred_check
      _
    $region7: #{tpu_custom_call.1} parent=1 // pred_check_branch
      %14 = sbr.rel (0) target = $region9
    $region8: #{tpu_custom_call.1} parent=1 // pred_region
      %s16 = ssub.s32 512, 512
      %17 = vsyncadd [#allocation3], %s16
      %s18 = sshll.u32 [#allocation2], 4
      %s19 = int_to_ptr.vmem [resolvable:$true] %s18
      %24 = dma.hbm_to_vmem [thread:$0]  %s1, 512, %s19, [#allocation3], 128, 128, 8
    $region9: #{tpu_custom_call.1} parent=1 // pred_fallthru
      _
    // Predicated region
    $region10: #{tpu_custom_call.1} parent=1 // pred_check
      _
    $region11: #{tpu_custom_call.1} parent=1 // pred_check_branch
      %26 = sbr.rel (0) target = $region13
    $region12: #{tpu_custom_call.1} parent=1 // pred_region
      _
    $region13: #{tpu_custom_call.1} parent=1 // pred_fallthru
      _
    // Predicated region
    $region14: #{tpu_custom_call.1} parent=1 // pred_check
      _
    $region15: #{tpu_custom_call.1} parent=1 // pred_check_branch
      %28 = sbr.rel (0) target = $region17
    $region16: #{tpu_custom_call.1} parent=1 // pred_region
      _
    $region17: #{tpu_custom_call.1} parent=1 // pred_fallthru
      _
    // Predicated region
    $region18: #{tpu_custom_call.1} parent=1 // pred_check
      _
    $region19: #{tpu_custom_call.1} parent=1 // pred_check_branch
      %30 = sbr.rel (0) target = $region21
    $region20: #{tpu_custom_call.1} parent=1 // pred_region
      %31 = dma.done [#allocation3], 512
    $region21: #{tpu_custom_call.1} parent=1 // pred_fallthru
      _
    %v32 = vld [vmem:[%s0] sm:$0xff]
    %v33 = vmul.f32 %v32, %v32
    %vm34 = vcmask 261120
    %v35 = vsel %vm34, %v33, 0.0
    %36 = vadd.xlane.f32.xlu0 %v35
    %v37 = vpop.xlane.xlu0 %36
    %v38 = vld [vmem:[#allocation2] sm:$0xff]
    %v39 = vld [vmem:[#allocation2 + $0x8] sm:$0xff]
    %v40 = vld [vmem:[#allocation2 + $0x10] sm:$0xff]
    %v41 = vld [vmem:[#allocation2 + $0x18] sm:$0xff]
    %v43 = vsel %vm34, %v32, 0
    %45 = vmatprep.subr.mxu0 0.0
    %46 = vmatpush1.msra.mxu0 %v38
    %47 = vmatprep.subr.mxu0 0.0
    %48 = vmatpush1.msra.mxu0 %v39
    %49 = vmatprep.subr.mxu0 0.0
    %50 = vmatpush1.msra.mxu0 %v40
    %51 = vmatprep.subr.mxu0 0.0
    %52 = vmatpush1.msra.mxu0 %v41
    %53 = vmatprep.subr.mxu0 0.0
    %54 = vmatpush1.msra.mxu0 0.0
    %55 = vmatprep.subr.mxu0 0.0
    %56 = vmatpush1.msra.mxu0 0.0
    %57 = vmatprep.subr.mxu0 0.0
    %58 = vmatpush1.msra.mxu0 0.0
    %59 = vmatprep.subr.mxu0 0.0
    %60 = vmatpush1.msra.mxu0 0.0
    %61 = vmatprep.subr.mxu0 0.0
    %62 = vmatpush1.msra.mxu0 0.0
    %63 = vmatprep.subr.mxu0 0.0
    %64 = vmatpush1.msra.mxu0 0.0
    %65 = vmatprep.subr.mxu0 0.0
    %66 = vmatpush1.msra.mxu0 0.0
    %67 = vmatprep.subr.mxu0 0.0
    %68 = vmatpush1.msra.mxu0 0.0
    %69 = vmatprep.subr.mxu0 0.0
    %70 = vmatpush1.msra.mxu0 0.0
    %71 = vmatprep.subr.mxu0 0.0
    %72 = vmatpush1.msra.mxu0 0.0
    %73 = vmatprep.subr.mxu0 0.0
    %74 = vmatpush1.msra.mxu0 0.0
    %75 = vmatprep.subr.mxu0 0.0
    %76 = vmatpush1.msra.mxu0 0.0
    %77 = vmatprep.subr.mxu0 0.0
    %78 = vmatpush1.msra.mxu0 0.0
    %79 = vmatprep.subr.mxu0 0.0
    %80 = vmatpush1.msra.mxu0 0.0
    %81 = vmatprep.subr.mxu0 0.0
    %82 = vmatpush1.msra.mxu0 0.0
    %83 = vmatprep.subr.mxu0 0.0
    %84 = vmatpush1.msra.mxu0 0.0
    %85 = vmatprep.subr.mxu0 0.0
    %86 = vmatpush1.msra.mxu0 0.0
    %87 = vmatprep.subr.mxu0 0.0
    %88 = vmatpush1.msra.mxu0 0.0
    %89 = vmatprep.subr.mxu0 0.0
    %90 = vmatpush1.msra.mxu0 0.0
    %91 = vmatprep.subr.mxu0 0.0
    %92 = vmatpush1.msra.mxu0 0.0
    %93 = vmatprep.subr.mxu0 0.0
    %94 = vmatpush1.msra.mxu0 0.0
    %95 = vmatprep.subr.mxu0 0.0
    %96 = vmatpush1.msra.mxu0 0.0
    %97 = vmatprep.subr.mxu0 0.0
    %98 = vmatpush1.msra.mxu0 0.0
    %99 = vmatprep.subr.mxu0 0.0
    %100 = vmatpush1.msra.mxu0 0.0
    %101 = vmatprep.subr.mxu0 0.0
    %102 = vmatpush1.msra.mxu0 0.0
    %103 = vmatprep.subr.mxu0 0.0
    %104 = vmatpush1.msra.mxu0 0.0
    %105 = vmatprep.subr.mxu0 0.0
    %106 = vmatpush1.msra.mxu0 0.0
    %107 = vmatprep.subr.mxu0 0.0
    %108 = vmatpush1.msra.mxu0 0.0
    %109 = vmatprep.mubr.f32.mxu0 0.0
    %110 = vmatmul.mubr.f32.gmra.mrb[0].mxu0 %v43
    %v111 = vpop.f32.mrb[0].mxu0
    %v112 = vadd.f32 0.0, %v111
    %v113 = vpop.f32.mrb[0].mxu0
    %114 = vdwg.mxu0
    %v115 = vld [vmem:[%s2] sm:$0x1]
    %v117 = vlaneseq
    %v118 = vshrl.u32 %v117, 7
    %v119 = vsub.s32 0, %v118
    %v120 = vrot.slane %v115, %v119
    %v122 = vadd.f32 %v37, %v120
    %v123 = vadd.f32 %v122, %v112
    %v124 = vld [vmem:[%s3] sm:$0xff]
    %v125 = vlaneseq
    %v126 = vand.u32 %v125, 127
    %s127 = smul.u32 0, 128
    %v128 = vstv %s127
    %v129 = vadd.s32 %v126, %v128
    %130 = vset.pattern.permute.xlu0 0
    %131 = vperm.xlu0 %130, %v124
    %v132 = vpop.permute.xlu0 %131
    %vm133 = vcmp.eq.s32.totalorder %v132, %v129
    %vm134 = vcmp.ge.s32.totalorder %v129, 4
    %v135 = vsel %vm134, 1, 0
    %vm136 = vcmp.eq.s32.totalorder %v135, 1
    %vm137 = vmor %vm133, %vm136
    %v138 = vmax.f32 %v123, 0.0
    %v139 = vrsqrt.pop %v138
    %v140 = vmul.f32 %v138, %v139
    %vm141 = vcmp.eq.f32.partialorder %v138, inf
    %v142 = vsel %vm141, %v138, %v140
    %vm143 = vcmp.eq.f32.partialorder %v138, 0.0
    %v144 = vand.u32 %v138, 2147483648
    %v145 = vsel %vm143, %v144, %v142
    %v146 = vmax.f32 %v145, 1e-08
    %v147 = vmin.f32 %v146, 1e+08
    %v148 = vsel %vm137, 0.0, %v147
    %v149 = vrot.slane %v148, 4
    %v150 = vadd.f32 %v148, %v149
    %v151 = vrot.slane %v150, 2
    %v152 = vadd.f32 %v150, %v151
    %v153 = vrot.slane %v152, 1
    %v154 = vadd.f32 %v152, %v153
    %155 = vst [vmem:[#allocation5] sm:$0x1] %v154
    // Predicated region
    $region22: #{tpu_custom_call.1} parent=1 // pred_check
      _
    $region23: #{tpu_custom_call.1} parent=1 // pred_check_branch
      %157 = sbr.rel (0) target = $region25
    $region24: #{tpu_custom_call.1} parent=1 // pred_region
      %s159 = ssub.s32 16, 16
      %160 = vsyncadd [#allocation4], %s159
      %s162 = sshll.u32 [#allocation5], 4
      %s163 = int_to_ptr.vmem [resolvable:$true] %s162
      %165 = dma.vmem_to_hbm [thread:$0]  %s163, 16, %s4, [#allocation4]
    $region25: #{tpu_custom_call.1} parent=1 // pred_fallthru
      _
    // Predicated region
    $region26: #{tpu_custom_call.1} parent=1 // pred_check
      _
    $region27: #{tpu_custom_call.1} parent=1 // pred_check_branch
      %167 = sbr.rel (0) target = $region29
    $region28: #{tpu_custom_call.1} parent=1 // pred_region
      %168 = dma.done [#allocation4], 16
    $region29: #{tpu_custom_call.1} parent=1 // pred_fallthru
      _
    %169 = vsyncpa [#allocation3], 1
    %170 = vsyncpa [#allocation4], 1

</llo_original>
